<compile_context>
chip_gen: v7x
topology: tpu7x:2x2x1
jax: 0.10.0
libtpu: 0.0.40
codegen_flags: <defaults>
</compile_context>

<pallas_src>
import jax
import jax.numpy as jnp
from jax.experimental import pallas as pl
from jax.experimental.pallas import tpu as pltpu

_LANES = 128


# ----------------------------------------------------------------------------
# Kernel
# ----------------------------------------------------------------------------
def _predict_kernel(a_ref, b_ref, e_ref):
    # e = sum(max(0, emb_bs - emb_as)^2, dim=1)   per batch row (f32 accumulate).
    tile_b, d = a_ref.shape
    if d > _LANES and d % _LANES == 0:
        # Lane-parallel (VPU) accumulation over 128-wide chunks with a few
        # independent accumulators (breaks the serial acc dependence), then a
        # single cross-lane (XLU) reduce per tile.
        n_chunks = d // _LANES
        n_acc = min(4, n_chunks)
        accs = [jnp.zeros((tile_b, _LANES), jnp.float32) for _ in range(n_acc)]
        for c in range(n_chunks):
            sl = slice(c * _LANES, (c + 1) * _LANES)
            diff = b_ref[:, sl].astype(jnp.float32) - a_ref[:, sl].astype(jnp.float32)
            viol = jnp.maximum(diff, 0.0)
            accs[c % n_acc] = accs[c % n_acc] + viol * viol
        acc = accs[0]
        for extra in accs[1:]:
            acc = acc + extra
        e_ref[...] = jnp.sum(acc, axis=1, keepdims=True)
    else:
        diff = b_ref[...].astype(jnp.float32) - a_ref[...].astype(jnp.float32)
        viol = jnp.maximum(diff, 0.0)
        e_ref[...] = jnp.sum(viol * viol, axis=1, keepdims=True)


# ----------------------------------------------------------------------------
# Generation-aware tiling helpers
# ----------------------------------------------------------------------------
def _round_up(x, m):
    return ((x + m - 1) // m) * m


def _tpu_topology():
    """(physical VMEM bytes per core, TensorCores per chip), with safe fallbacks."""
    vmem = 64 << 20  # conservative fallback (v7x-sized)
    cores = 1
    try:
        info = pltpu.get_tpu_info()
        vmem = int(getattr(info, "vmem_capacity_bytes", vmem))
        cores = None
        for attr in ("num_cores", "core_count", "tensorcores_per_chip", "num_tensorcores"):
            v = getattr(info, attr, None)
            if isinstance(v, int) and v > 0:
                cores = v
                break
        if cores is None:
            # v7x: 64 MiB VMEM/TC and 2 TCs; v5e/v6e: 128 MiB VMEM and 1 TC.
            cores = 2 if vmem <= (64 << 20) else 1
    except Exception:
        vmem, cores = 64 << 20, 1
    return vmem, cores


def _choose_tile_b(batch, hidden, itemsize, row_align, vmem_cap, n_tc):
    # Input-tile budget: 2 inputs x 2 pipeline buffers share min(48 MiB, VMEM/2)
    # -> ~12 MiB per input block on 128 MiB v5e/v6e, ~8 MiB on 64 MiB v7x.
    input_budget = min(48 << 20, vmem_cap // 2)
    per_row = 4 * hidden * itemsize  # 2 inputs x 2 buffers, one row
    cap = max(row_align, (input_budget // per_row) // row_align * row_align)
    if batch <= cap:
        if n_tc >= 2 and batch > 2 * row_align:
            # Split so both v7x TensorCores get a shard (never done on 1-TC chips:
            # the grid is a serial loop there and splitting only adds overhead).
            return _round_up(pl.cdiv(batch, 2), row_align)
        return batch  # single full-array block (no divisibility constraint)
    return cap


# ----------------------------------------------------------------------------
# Wrappers (module API)
# ----------------------------------------------------------------------------
def order_embedder_forward(emb_as, emb_bs):
    """OrderEmbedder.forward: identity on the pair (no data movement)."""
    return emb_as, emb_bs


def order_embedder_predict(emb_as, emb_bs, *, tile_b=None):
    """OrderEmbedder.predict: e = sum(relu(emb_bs - emb_as)^2, dim=1) -> (B,) f32.

    HBM-bandwidth bound: prefer bf16 inputs at the call boundary (halves HBM
    bytes); accumulation is f32 inside the kernel either way, and the output is
    always f32.
    """
    B, D = emb_as.shape
    itemsize = jnp.dtype(emb_as.dtype).itemsize
    row_align = 16 if itemsize < 4 else 8  # full sublane-packed vregs for bf16
    vmem_cap, n_tc = _tpu_topology()
    if tile_b is None:
        tile_b = _choose_tile_b(B, D, itemsize, row_align, vmem_cap, n_tc)

    # No full-array padding: ragged batches use a partial final block whose
    # out-of-range rows are masked on writeback (rows are independent).
    grid = pl.cdiv(B, tile_b)

    # Generation-aware VMEM limit: pipelined input buffers + in-kernel f32
    # intermediates (upcast chunks + accumulators) + headroom, capped at 3/4 of
    # physical VMEM (<= 96 MiB on 128 MiB parts, <= 48 MiB on v7x).
    in_bytes = 2 * 2 * tile_b * D * itemsize
    scratch_bytes = 6 * tile_b * min(D, 4 * _LANES) * 4
    vmem_limit = in_bytes + scratch_bytes + (4 << 20)
    vmem_limit = min(max(vmem_limit, 32 << 20), (vmem_cap * 3) // 4)

    e2d = pl.pallas_call(
        _predict_kernel,
        out_shape=jax.ShapeDtypeStruct((B, 1), jnp.float32),
        grid_spec=pltpu.PrefetchScalarGridSpec(
            num_scalar_prefetch=0,
            grid=(grid,),
            in_specs=[
                pl.BlockSpec((tile_b, D), lambda i: (i, 0)),
                pl.BlockSpec((tile_b, D), lambda i: (i, 0)),
            ],
            out_specs=pl.BlockSpec((tile_b, 1), lambda i: (i, 0)),
        ),
        compiler_params=pltpu.CompilerParams(
            dimension_semantics=("parallel",),
            vmem_limit_bytes=int(vmem_limit),
        ),
    )(emb_as, emb_bs)
    return e2d[:, 0]  # match torch.sum(..., dim=1) output shape (B,)


# ----------------------------------------------------------------------------
# Deterministic (unused) parameter init for clf_model: Linear(1, 2)
# ----------------------------------------------------------------------------
def init_clf_params():
    kw, kb = jax.random.split(jax.random.PRNGKey(42))
    w = jax.random.uniform(kw, (2, 1), jnp.float32, -1.0, 1.0)
    b = jax.random.uniform(kb, (2,), jnp.float32, -1.0, 1.0)
    return {"clf_w": w, "clf_b": b}


# ----------------------------------------------------------------------------
# Main
# ----------------------------------------------------------------------------
if __name__ == "__main__":
    key = jax.random.PRNGKey(0)
    k_a, k_b = jax.random.split(key)

    # Small, module-consistent shapes: ragged batch and a hidden_dim spanning
    # multiple vregs (exercises the chunked lane-parallel reduce).
    B, D = 13, 256
    emb_as = jax.random.normal(k_a, (B, D), jnp.float32)
    emb_bs = jax.random.normal(k_b, (B, D), jnp.float32)

    _ = init_clf_params()  # built in __init__, unused by forward/predict

    # forward (identity)
    out_a, out_b = order_embedder_forward(emb_as, emb_bs)
    assert out_a is emb_as and out_b is emb_bs

    e_ref = jnp.sum(jnp.maximum(emb_bs - emb_as, 0.0) ** 2, axis=1)

    # predict, auto-tiled (single full-array block on 1-TC chips, 2 shards on v7x)
    e = jax.block_until_ready(order_embedder_predict(emb_as, emb_bs))
    assert e.shape == (B,)
    assert jnp.allclose(e, e_ref, rtol=1e-5, atol=1e-5)

    # predict with a forced small tile: multi-step grid with a partial (ragged)
    # final block -- no jnp.pad of the inputs anywhere.
    e_tiled = jax.block_until_ready(order_embedder_predict(emb_as, emb_bs, tile_b=8))
    assert e_tiled.shape == (B,)
    assert jnp.allclose(e_tiled, e_ref, rtol=1e-5, atol=1e-5)

    # predict with bf16 inputs (half the HBM traffic; f32 accumulation inside)
    e_bf16 = jax.block_until_ready(
        order_embedder_predict(emb_as.astype(jnp.bfloat16),
                               emb_bs.astype(jnp.bfloat16))
    )
    assert e_bf16.shape == (B,)
    assert jnp.allclose(e_bf16, e_ref, rtol=2e-2, atol=2e-2)

    print("KERNEL_OK")
</pallas_src>

<mosaic_0001>
module attributes {stable_mosaic.version = 11 : i64} {
  func.func @_predict_kernel(%arg0: i32, %arg1: memref<13x256xf32, #tpu.memory_space<vmem>>, %arg2: memref<13x256xf32, #tpu.memory_space<vmem>>, %arg3: memref<13x1xf32, #tpu.memory_space<vmem>>) attributes {dimension_semantics = [#tpu.dimension_semantics<parallel>], iteration_bounds = array<i64: 1>, scalar_prefetch = 0 : i64, scratch_operands = 0 : i64, tpu.core_type = #tpu.core_type<tc>, window_params = [{transform_indices = @transform_0, window_bounds = array<i64: 13, 256>}, {transform_indices = @transform_1, window_bounds = array<i64: 13, 256>}, {transform_indices = @transform_2, window_bounds = array<i64: 13, 1>}]} {
    %cst = arith.constant 0.000000e+00 : f32
    %0 = vector.broadcast %cst : f32 to vector<13x128xf32>
    %cst_0 = arith.constant 0.000000e+00 : f32
    %1 = vector.broadcast %cst_0 : f32 to vector<13x128xf32>
    %c0 = arith.constant 0 : index
    %c0_1 = arith.constant 0 : index
    %2 = vector.load %arg2[%c0, %c0_1] : memref<13x256xf32, #tpu.memory_space<vmem>>, vector<13x128xf32>
    %c0_2 = arith.constant 0 : index
    %c0_3 = arith.constant 0 : index
    %3 = vector.load %arg1[%c0_2, %c0_3] : memref<13x256xf32, #tpu.memory_space<vmem>>, vector<13x128xf32>
    %4 = arith.subf %2, %3 : vector<13x128xf32>
    %cst_4 = arith.constant 0.000000e+00 : f32
    %5 = vector.broadcast %cst_4 : f32 to vector<13x128xf32>
    %6 = arith.maximumf %4, %5 : vector<13x128xf32>
    %7 = arith.mulf %6, %6 : vector<13x128xf32>
    %8 = arith.addf %0, %7 : vector<13x128xf32>
    %c0_5 = arith.constant 0 : index
    %c128 = arith.constant 128 : index
    %9 = vector.load %arg2[%c0_5, %c128] : memref<13x256xf32, #tpu.memory_space<vmem>>, vector<13x128xf32>
    %c0_6 = arith.constant 0 : index
    %c128_7 = arith.constant 128 : index
    %10 = vector.load %arg1[%c0_6, %c128_7] : memref<13x256xf32, #tpu.memory_space<vmem>>, vector<13x128xf32>
    %11 = arith.subf %9, %10 : vector<13x128xf32>
    %cst_8 = arith.constant 0.000000e+00 : f32
    %12 = vector.broadcast %cst_8 : f32 to vector<13x128xf32>
    %13 = arith.maximumf %11, %12 : vector<13x128xf32>
    %14 = arith.mulf %13, %13 : vector<13x128xf32>
    %15 = arith.addf %1, %14 : vector<13x128xf32>
    %16 = arith.addf %8, %15 : vector<13x128xf32>
    %cst_9 = arith.constant dense<0.000000e+00> : vector<13xf32>
    %17 = vector.multi_reduction <add>, %16, %cst_9 [1] : vector<13x128xf32> to vector<13xf32>
    %18 = vector.shape_cast %17 : vector<13xf32> to vector<13x1xf32>
    %c0_10 = arith.constant 0 : index
    %c0_11 = arith.constant 0 : index
    %19 = vector.load %arg3[%c0_10, %c0_11] : memref<13x1xf32, #tpu.memory_space<vmem>>, vector<13x1xf32>
    tpu.vector_store %arg3[%c0_10, %c0_11], %18 {strides = array<i32>} : memref<13x1xf32, #tpu.memory_space<vmem>>, vector<13x1xf32>,
    return
  }
  func.func @transform_0(%arg0: i32) -> (i32, i32) {
    %c0_i32 = arith.constant 0 : i32
    %c0_i32_0 = arith.constant 0 : i32
    return %arg0, %c0_i32 : i32, i32
  }
  func.func @transform_1(%arg0: i32) -> (i32, i32) {
    %c0_i32 = arith.constant 0 : i32
    %c0_i32_0 = arith.constant 0 : i32
    return %arg0, %c0_i32 : i32, i32
  }
  func.func @transform_2(%arg0: i32) -> (i32, i32) {
    %c0_i32 = arith.constant 0 : i32
    %c0_i32_0 = arith.constant 0 : i32
    return %arg0, %c0_i32 : i32, i32
  }
}

</mosaic_0001>

<llo_original>
// kernel: tpu_custom_call.1
$region0: #{tpu_custom_call.1}
  #allocation0 [shape = 'u32[]', space=smem, size = 0x4, offset = 0x4, fixed_abs, tag = 'smem constant byte address 0x4 - core index']
  #allocation1 [shape = 'u32[144,128]{1,0:T(1,128)}', space=vmem, size = 0x12000, scoped, tag = 'internal scratch']
  %s0 = inlined_call_operand.hbm [shape: f32[13,256], index: 0, kind: input, shape index: {}]
  %s1 = inlined_call_operand.hbm [shape: f32[13,256], index: 1, kind: input, shape index: {}]
  %s2 = inlined_call_operand.vmem [shape: f32[13,1], index: 2, kind: output, shape index: {}]
  %s3 = sld [smem:[#allocation0]]
  $region26: #{tpu_custom_call.1} parent=0
    _
  %s5 = ssub.s32 1, %s3
  %s6 = scalar_select 0, %s5, %s3
  $region1: #{tpu_custom_call.1} parent=0
    #allocation2 [shape = 'u8[16384]{0}', space=vmem, size = 0x4000, scoped, tag = 'input window, operand 0, single buffered']
    #allocation3 [shape = 's32[1]{0}', space=sflag, size = 0x4, scoped, tag = 'scoped memory for tpu_custom_call.1']
    #allocation4 [shape = 'u8[16384]{0}', space=vmem, size = 0x4000, scoped, tag = 'input window, operand 1, single buffered']
    #allocation5 [shape = 's32[1]{0}', space=sflag, size = 0x4, scoped, tag = 'scoped memory for tpu_custom_call.1']
    %7 = vsyncpa [#allocation3], 0
    %8 = vsyncpa [#allocation5], 0
    // Predicated region
    $region2: #{tpu_custom_call.1} parent=1 // pred_check
      _
    $region3: #{tpu_custom_call.1} parent=1 // pred_check_branch
      %10 = sbr.rel (0) target = $region5
    $region4: #{tpu_custom_call.1} parent=1 // pred_region
      %s12 = ssub.s32 512, 512
      %13 = vsyncadd [#allocation3], %s12
      %s14 = sshll.u32 [#allocation2], 4
      %s15 = int_to_ptr.vmem [resolvable:$true] %s14
      %20 = dma.hbm_to_vmem [thread:$0]  %s0, 512, %s15, [#allocation3], 256, 256, 16
    $region5: #{tpu_custom_call.1} parent=1 // pred_fallthru
      _
    // Predicated region
    $region6: #{tpu_custom_call.1} parent=1 // pred_check
      _
    $region7: #{tpu_custom_call.1} parent=1 // pred_check_branch
      %22 = sbr.rel (0) target = $region9
    $region8: #{tpu_custom_call.1} parent=1 // pred_region
      %s24 = ssub.s32 512, 512
      %25 = vsyncadd [#allocation5], %s24
      %s26 = sshll.u32 [#allocation4], 4
      %s27 = int_to_ptr.vmem [resolvable:$true] %s26
      %32 = dma.hbm_to_vmem [thread:$0]  %s1, 512, %s27, [#allocation5], 256, 256, 16
    $region9: #{tpu_custom_call.1} parent=1 // pred_fallthru
      _
    // Predicated region
    $region10: #{tpu_custom_call.1} parent=1 // pred_check
      _
    $region11: #{tpu_custom_call.1} parent=1 // pred_check_branch
      %34 = sbr.rel (0) target = $region13
    $region12: #{tpu_custom_call.1} parent=1 // pred_region
      %35 = dma.done [#allocation3], 512
    $region13: #{tpu_custom_call.1} parent=1 // pred_fallthru
      _
    // Predicated region
    $region14: #{tpu_custom_call.1} parent=1 // pred_check
      _
    $region15: #{tpu_custom_call.1} parent=1 // pred_check_branch
      %37 = sbr.rel (0) target = $region17
    $region16: #{tpu_custom_call.1} parent=1 // pred_region
      %38 = dma.done [#allocation5], 512
    $region17: #{tpu_custom_call.1} parent=1 // pred_fallthru
      _
    %v39 = vld [vmem:[#allocation4] sm:$0xff]
    %v40 = vld [vmem:[#allocation4 + $0x10] sm:$0x1f]
    %v41 = vld [vmem:[#allocation2] sm:$0xff]
    %v42 = vld [vmem:[#allocation2 + $0x10] sm:$0x1f]
    %v43 = vsub.f32 %v39, %v41
    %v44 = vsub.f32 %v40, %v42
    %v45 = vmax.f32 %v43, 0.0
    %v46 = vmax.f32 %v44, 0.0
    %v47 = vmul.f32 %v45, %v45
    %v48 = vmul.f32 %v46, %v46
    %v49 = vadd.f32 %v47, 0.0
    %v50 = vadd.f32 %v48, 0.0
    %v51 = vld [vmem:[#allocation4 + $0x8] sm:$0xff]
    %v52 = vld [vmem:[#allocation4 + $0x18] sm:$0x1f]
    %v53 = vld [vmem:[#allocation2 + $0x8] sm:$0xff]
    %v54 = vld [vmem:[#allocation2 + $0x18] sm:$0x1f]
    %v55 = vsub.f32 %v51, %v53
    %v56 = vsub.f32 %v52, %v54
    %v57 = vmax.f32 %v55, 0.0
    %v58 = vmax.f32 %v56, 0.0
    %v59 = vmul.f32 %v57, %v57
    %v60 = vmul.f32 %v58, %v58
    %v61 = vadd.f32 %v59, 0.0
    %v62 = vadd.f32 %v60, 0.0
    %v63 = vadd.f32 %v49, %v61
    %v64 = vadd.f32 %v50, %v62
    %65 = vadd.xlane.f32.xlu0 %v63
    %v66 = vpop.xlane.xlu0 %65
    %vm67 = vcmask 1044480
    %v68 = vsel %vm67, %v64, 0.0
    %69 = vadd.xlane.f32.xlu0 %v68
    %v70 = vpop.xlane.xlu0 %69
    %vm71 = vcmask 7168
    %72 = vst.msk [vmem:[%s2] sm:$0xff] %vm71, %v66
    %vm73 = vcmask 4096
    %74 = vst.msk [vmem:[%s2 + $0x8] sm:$0x1f] %vm73, %v70
    // Predicated region
    $region18: #{tpu_custom_call.1} parent=1 // pred_check
      _
    $region19: #{tpu_custom_call.1} parent=1 // pred_check_branch
      %76 = sbr.rel (0) target = $region21
    $region20: #{tpu_custom_call.1} parent=1 // pred_region
      _
    $region21: #{tpu_custom_call.1} parent=1 // pred_fallthru
      _
    // Predicated region
    $region22: #{tpu_custom_call.1} parent=1 // pred_check
      _
    $region23: #{tpu_custom_call.1} parent=1 // pred_check_branch
      %78 = sbr.rel (0) target = $region25
    $region24: #{tpu_custom_call.1} parent=1 // pred_region
      _
    $region25: #{tpu_custom_call.1} parent=1 // pred_fallthru
      _
    %79 = vsyncpa [#allocation3], 1
    %80 = vsyncpa [#allocation5], 1

</llo_original>
